<compile_context>
chip_gen: v7x
topology: tpu7x:2x2x1
jax: 0.10.0
libtpu: 0.0.40
codegen_flags: <defaults>
</compile_context>

<pallas_src>
import jax
import jax.numpy as jnp
from jax.experimental import pallas as pl
from jax.experimental.pallas import tpu as pltpu


# ----------------------------------------------------------------------------
# Kernels
# ----------------------------------------------------------------------------

def _gcn_kernel_reorder(seq_ref, adj_ref, w_ref, bias_ref, alpha_ref, out_ref):
    """(adj @ seq) @ W ordering, used when F_in <= F_out (fewer MXU FLOPs).

    seq_ref:   (bt, N, F_in)      compute dtype (bf16 default)
    adj_ref:   (bt, tm, N)        compute dtype
    w_ref:     (F_in, F_out)      f32, pre-transposed
    bias_ref:  (1, F_out)         f32
    alpha_ref: (1, 1) SMEM        f32 PReLU slope
    out_ref:   (bt, tm, F_out)    f32
    """
    bt, tm, _ = adj_ref.shape
    f_in = seq_ref.shape[2]
    f_out = w_ref.shape[1]

    # Graph aggregation first: (bt, tm, N) @ (bt, N, F_in), f32 accumulation.
    agg = jnp.einsum("brm,bmf->brf", adj_ref[...], seq_ref[...],
                     preferred_element_type=jnp.float32)

    # Linear stage on the (smaller) aggregated features.  Weight kept in f32,
    # so there is no extra truncation of the intermediate.  tm is a multiple
    # of 8 (or == N), so merging (bt, tm) is a free relayout for the f32 agg.
    out = jnp.dot(agg.reshape(bt * tm, f_in), w_ref[...],
                  preferred_element_type=jnp.float32).reshape(bt, tm, f_out)

    out = out + bias_ref[...]
    alpha = alpha_ref[0, 0]
    out_ref[...] = jnp.where(out >= 0, out, alpha * out).astype(out_ref.dtype)


def _gcn_kernel_fts_scratch(seq_ref, adj_ref, w_ref, bias_ref, alpha_ref,
                            out_ref, fts_ref):
    """adj @ (seq @ W) ordering, used when F_in > F_out.

    fts = seq @ W is computed ONCE per batch tile (first row tile) into the
    VMEM scratch `fts_ref` and reused across the row-tile ("arbitrary") axis.
    fts is held in the compute dtype so the large aggregation matmul stays on
    the fast MXU path (slight extra truncation when bf16 is used).
    """
    bt, n, f_in = seq_ref.shape
    f_out = w_ref.shape[1]

    @pl.when(pl.program_id(1) == 0)
    def _():
        # Note: merging (bt, N) is only a free relayout when N is a multiple
        # of the sublane tile (8 f32 / 16 bf16); otherwise Mosaic inserts one
        # in-VMEM copy per batch tile (correct, just not free).
        fts = jnp.dot(seq_ref[...].reshape(bt * n, f_in), w_ref[...],
                      preferred_element_type=jnp.float32)
        fts_ref[...] = fts.reshape(bt, n, f_out).astype(fts_ref.dtype)

    out = jnp.einsum("brn,bno->bro", adj_ref[...], fts_ref[...],
                     preferred_element_type=jnp.float32)
    out = out + bias_ref[...]
    alpha = alpha_ref[0, 0]
    out_ref[...] = jnp.where(out >= 0, out, alpha * out).astype(out_ref.dtype)


# ----------------------------------------------------------------------------
# Generation-aware configuration helpers
# ----------------------------------------------------------------------------

def _vmem_limit_bytes():
    """~75% of physical VMEM: ~48 MiB on v7x (64), ~96 MiB on v5e/v6e (128)."""
    cap = None
    try:
        info = pltpu.get_tpu_info()
        cap = getattr(info, "vmem_capacity_bytes", None)
    except Exception:
        cap = None
    if not cap:
        return 48 * 1024 * 1024  # safe on every generation (v7x TC has 64 MiB)
    return (int(cap) * 3) // 4


def _num_tensorcores():
    """2 TensorCores per chip on v7x; 1 on v5e/v6e (conservative default 1)."""
    try:
        kind = jax.devices()[0].device_kind.lower()
    except Exception:
        return 1
    return 2 if "v7" in kind else 1


def _divisors_desc(n):
    return [d for d in range(n, 0, -1) if n % d == 0]


def _select_tiles(B, N, F_in, F_out, itemsize, budget, num_tc, reorder):
    """Pick (bt, tm): largest blocks that fit `budget` (double-buffered),
    preferring a grid-step count that splits evenly across TensorCores."""
    best, best_key = None, None
    for cbt in _divisors_desc(B):
        for ctm in _divisors_desc(N):
            if ctm != N and ctm % 8 != 0:
                continue  # keep row-tiled adj/out blocks sublane aligned
            adj_blk = cbt * ctm * N * itemsize
            seq_blk = cbt * N * F_in * itemsize
            out_blk = cbt * ctm * F_out * 4
            fixed = F_in * F_out * 4 + F_out * 4
            scratch = 0 if reorder else cbt * N * F_out * itemsize
            total = 2 * (adj_blk + seq_blk + out_blk) + fixed + scratch
            if total > budget:
                continue
            steps = (B // cbt) * (N // ctm)
            uneven = 1 if (num_tc > 1 and steps % num_tc != 0) else 0
            # even TC split > fewest grid steps > bigger batch tile
            key = (uneven, steps, -cbt)
            if best_key is None or key < best_key:
                best_key, best = key, (cbt, ctm)
    if best is None:
        valid_tm = [d for d in _divisors_desc(N) if d == N or d % 8 == 0]
        best = (1, min(valid_tm))
    return best


# ----------------------------------------------------------------------------
# Wrapper
# ----------------------------------------------------------------------------

def gcn_forward(seq, adj, weight, bias, alpha, *, bt=None, tm=None,
                use_bf16=True):
    B, N, F_in = seq.shape
    F_out, F_in_w = weight.shape
    assert F_in_w == F_in

    cdt = jnp.bfloat16 if use_bf16 else jnp.float32
    itemsize = 2 if use_bf16 else 4

    # Pre-transpose the weight once in XLA: (F_out, F_in) -> (F_in, F_out).
    # Kept in f32 (tiny, grid-invariant, keeps the linear stage full precision).
    w_t = jnp.transpose(weight.astype(jnp.float32))
    bias2d = bias.astype(jnp.float32).reshape(1, F_out)
    alpha2d = jnp.asarray(alpha, jnp.float32).reshape(1, 1)

    # bf16 matmul operands by default: the kernel is HBM-bound on adj on every
    # generation, so halving adj/seq bytes is the main lever.  Accumulation,
    # bias and PReLU stay f32.
    seq_c = seq.astype(cdt)
    adj_c = adj.astype(cdt)

    # Matmul reassociation: when F_in <= F_out, (adj @ seq) @ W cuts the
    # dominant B*N^2*C term from F_out to F_in and removes the fts scratch.
    reorder = F_in <= F_out

    vmem_limit = _vmem_limit_bytes()
    num_tc = _num_tensorcores()
    if bt is None or tm is None:
        sel_bt, sel_tm = _select_tiles(B, N, F_in, F_out, itemsize,
                                       int(vmem_limit * 0.8), num_tc, reorder)
        bt = sel_bt if bt is None else bt
        tm = sel_tm if tm is None else tm
    assert B % bt == 0 and N % tm == 0
    assert tm == N or tm % 8 == 0

    grid = (B // bt, N // tm)

    in_specs = [
        pl.BlockSpec((bt, N, F_in), lambda b, r: (b, 0, 0)),   # seq (row-invariant)
        pl.BlockSpec((bt, tm, N), lambda b, r: (b, r, 0)),     # adj row tile
        pl.BlockSpec((F_in, F_out), lambda b, r: (0, 0)),      # weight (grid-invariant)
        pl.BlockSpec((1, F_out), lambda b, r: (0, 0)),         # bias (grid-invariant)
        pl.BlockSpec(memory_space=pltpu.MemorySpace.SMEM),     # PReLU alpha scalar
    ]
    out_spec = pl.BlockSpec((bt, tm, F_out), lambda b, r: (b, r, 0))

    if reorder:
        kernel = _gcn_kernel_reorder
        scratch_shapes = []
        dim_sem = ("parallel", "parallel")
    else:
        kernel = _gcn_kernel_fts_scratch
        scratch_shapes = [pltpu.VMEM((bt, N, F_out), cdt)]
        dim_sem = ("parallel", "arbitrary")  # fts scratch reused across row tiles

    out = pl.pallas_call(
        kernel,
        out_shape=jax.ShapeDtypeStruct((B, N, F_out), jnp.float32),
        grid_spec=pltpu.PrefetchScalarGridSpec(
            num_scalar_prefetch=0,
            grid=grid,
            in_specs=in_specs,
            out_specs=out_spec,
            scratch_shapes=scratch_shapes,
        ),
        compiler_params=pltpu.CompilerParams(
            dimension_semantics=dim_sem,
            vmem_limit_bytes=vmem_limit,
        ),
    )(seq_c, adj_c, w_t, bias2d, alpha2d)
    return out


def reference_forward(seq, adj, weight, bias, alpha):
    seq_fts = jnp.einsum("bnf,of->bno", seq, weight)
    out = jnp.einsum("bnm,bmo->bno", adj, seq_fts)
    out = out + bias
    return jnp.where(out >= 0, out, alpha * out)


if __name__ == "__main__":
    key = jax.random.PRNGKey(0)
    k_seq, k_adj, k_w, k_w2 = jax.random.split(key, 4)

    B, N = 2, 16

    # ---- Config 1: F_in < F_out  -> (adj @ seq) @ W path -------------------
    F_in, F_out = 32, 64
    seq = jax.random.normal(k_seq, (B, N, F_in), dtype=jnp.float32)
    a = jax.random.uniform(k_adj, (B, N, N), dtype=jnp.float32)
    adj = (a + jnp.swapaxes(a, 1, 2)) * 0.5
    adj = adj / jnp.sum(adj, axis=-1, keepdims=True)

    limit = (6.0 / (F_in + F_out)) ** 0.5
    weight = jax.random.uniform(k_w, (F_out, F_in), dtype=jnp.float32,
                                minval=-limit, maxval=limit)
    bias = jnp.zeros((F_out,), dtype=jnp.float32)
    alpha = 0.25

    ref = reference_forward(seq, adj, weight, bias, alpha)

    # f32 operands: tight tolerance.
    out_f32 = gcn_forward(seq, adj, weight, bias, alpha, use_bf16=False)
    jax.block_until_ready(out_f32)
    assert out_f32.shape == (B, N, F_out)
    assert jnp.allclose(out_f32, ref, atol=1e-4, rtol=1e-4)

    # Default path (bf16 matmul operands, auto tiles): looser tolerance.
    out_bf16 = gcn_forward(seq, adj, weight, bias, alpha)
    jax.block_until_ready(out_bf16)
    assert out_bf16.shape == (B, N, F_out)
    assert jnp.allclose(out_bf16, ref, atol=5e-2, rtol=5e-2)

    # ---- Config 2: F_in > F_out  -> fts-scratch path (row-tiled) -----------
    F_in2, F_out2 = 64, 32
    seq2 = jax.random.normal(k_seq, (B, N, F_in2), dtype=jnp.float32)
    limit2 = (6.0 / (F_in2 + F_out2)) ** 0.5
    weight2 = jax.random.uniform(k_w2, (F_out2, F_in2), dtype=jnp.float32,
                                 minval=-limit2, maxval=limit2)
    bias2 = jnp.zeros((F_out2,), dtype=jnp.float32)

    ref2 = reference_forward(seq2, adj, weight2, bias2, alpha)

    # Force multiple batch and row steps to exercise the scratch reuse.
    out2_f32 = gcn_forward(seq2, adj, weight2, bias2, alpha,
                           bt=1, tm=8, use_bf16=False)
    jax.block_until_ready(out2_f32)
    assert out2_f32.shape == (B, N, F_out2)
    assert jnp.allclose(out2_f32, ref2, atol=1e-4, rtol=1e-4)

    out2_bf16 = gcn_forward(seq2, adj, weight2, bias2, alpha)
    jax.block_until_ready(out2_bf16)
    assert out2_bf16.shape == (B, N, F_out2)
    assert jnp.allclose(out2_bf16, ref2, atol=5e-2, rtol=5e-2)

    print("KERNEL_OK")
</pallas_src>

<mosaic_0001>
module attributes {stable_mosaic.version = 11 : i64} {
  func.func @_gcn_kernel_reorder(%arg0: i32, %arg1: i32, %arg2: memref<2x16x32xf32, #tpu.memory_space<vmem>>, %arg3: memref<2x16x16xf32, #tpu.memory_space<vmem>>, %arg4: memref<32x64xf32, #tpu.memory_space<vmem>>, %arg5: memref<1x64xf32, #tpu.memory_space<vmem>>, %arg6: memref<1x1xf32, #tpu.memory_space<smem>>, %arg7: memref<2x16x64xf32, #tpu.memory_space<vmem>>) attributes {dimension_semantics = [#tpu.dimension_semantics<parallel>, #tpu.dimension_semantics<parallel>], iteration_bounds = array<i64: 1, 1>, scalar_prefetch = 0 : i64, scratch_operands = 0 : i64, tpu.core_type = #tpu.core_type<tc>, window_params = [{transform_indices = @transform_0, window_bounds = array<i64: 2, 16, 32>}, {transform_indices = @transform_1, window_bounds = array<i64: 2, 16, 16>}, {pipeline_mode = #tpu.pipeline_mode<synchronous>, transform_indices = @transform_2, window_bounds = array<i64: 32, 64>}, {pipeline_mode = #tpu.pipeline_mode<synchronous>, transform_indices = @transform_3, window_bounds = array<i64: 1, 64>}, {transform_indices = @transform_4, window_bounds = array<i64: 1, 1>}, {transform_indices = @transform_5, window_bounds = array<i64: 2, 16, 64>}]} {
    %c0 = arith.constant 0 : index
    %c0_0 = arith.constant 0 : index
    %c0_1 = arith.constant 0 : index
    %0 = vector.load %arg3[%c0, %c0_0, %c0_1] : memref<2x16x16xf32, #tpu.memory_space<vmem>>, vector<2x16x16xf32>
    %c0_2 = arith.constant 0 : index
    %c0_3 = arith.constant 0 : index
    %c0_4 = arith.constant 0 : index
    %1 = vector.load %arg2[%c0_2, %c0_3, %c0_4] : memref<2x16x32xf32, #tpu.memory_space<vmem>>, vector<2x16x32xf32>
    "tpu.trace_start"() <{level = 10 : i32, message = "brm,bmf->brf"}> : () -> ()
    %cst = arith.constant dense<0.000000e+00> : vector<2x16x32xf32>
    %2 = tpu.matmul %0, %1, %cst {dimension_numbers = #tpu.dot_dimension_numbers<[2], [1], [1], [2], [0, 0, 0, 1, 1, 2], [0], [0]>} : vector<2x16x16xf32>, vector<2x16x32xf32>, vector<2x16x32xf32> -> vector<2x16x32xf32>
    "tpu.trace_stop"() : () -> ()
    %3 = vector.shape_cast %2 : vector<2x16x32xf32> to vector<32x32xf32>
    %c0_5 = arith.constant 0 : index
    %c0_6 = arith.constant 0 : index
    %4 = vector.load %arg4[%c0_5, %c0_6] : memref<32x64xf32, #tpu.memory_space<vmem>>, vector<32x64xf32>
    %cst_7 = arith.constant dense<0.000000e+00> : vector<32x64xf32>
    %5 = tpu.matmul %3, %4, %cst_7 {dimension_numbers = #tpu.dot_dimension_numbers<[1], [0], [0], [1], [0, 0, 1, 1], [], []>} : vector<32x32xf32>, vector<32x64xf32>, vector<32x64xf32> -> vector<32x64xf32>
    %6 = vector.shape_cast %5 : vector<32x64xf32> to vector<2x16x64xf32>
    %c0_8 = arith.constant 0 : index
    %c0_9 = arith.constant 0 : index
    %7 = vector.load %arg5[%c0_8, %c0_9] : memref<1x64xf32, #tpu.memory_space<vmem>>, vector<1x64xf32>
    %8 = vector.shape_cast %7 : vector<1x64xf32> to vector<1x1x64xf32>
    %9 = vector.broadcast %8 : vector<1x1x64xf32> to vector<2x16x64xf32>
    %10 = arith.addf %6, %9 : vector<2x16x64xf32>
    %c0_10 = arith.constant 0 : index
    %c0_11 = arith.constant 0 : index
    %11 = memref.load %arg6[%c0_10, %c0_11] : memref<1x1xf32, #tpu.memory_space<smem>>
    %cst_12 = arith.constant 0.000000e+00 : f32
    %12 = vector.broadcast %cst_12 : f32 to vector<2x16x64xf32>
    %13 = arith.cmpf oge, %10, %12 : vector<2x16x64xf32>
    %14 = vector.broadcast %11 : f32 to vector<2x16x64xf32>
    %15 = arith.mulf %14, %10 : vector<2x16x64xf32>
    %16 = arith.select %13, %10, %15 : vector<2x16x64xi1>, vector<2x16x64xf32>
    %c0_13 = arith.constant 0 : index
    %c0_14 = arith.constant 0 : index
    %c0_15 = arith.constant 0 : index
    %17 = vector.load %arg7[%c0_13, %c0_14, %c0_15] : memref<2x16x64xf32, #tpu.memory_space<vmem>>, vector<2x16x64xf32>
    tpu.vector_store %arg7[%c0_13, %c0_14, %c0_15], %16 {strides = array<i32>} : memref<2x16x64xf32, #tpu.memory_space<vmem>>, vector<2x16x64xf32>,
    return
  }
  func.func @transform_0(%arg0: i32, %arg1: i32) -> (i32, i32, i32) {
    %c0_i32 = arith.constant 0 : i32
    %c0_i32_0 = arith.constant 0 : i32
    %c0_i32_1 = arith.constant 0 : i32
    return %arg0, %c0_i32, %c0_i32_0 : i32, i32, i32
  }
  func.func @transform_1(%arg0: i32, %arg1: i32) -> (i32, i32, i32) {
    %c0_i32 = arith.constant 0 : i32
    %c0_i32_0 = arith.constant 0 : i32
    return %arg0, %arg1, %c0_i32 : i32, i32, i32
  }
  func.func @transform_2(%arg0: i32, %arg1: i32) -> (i32, i32) {
    %c0_i32 = arith.constant 0 : i32
    %c0_i32_0 = arith.constant 0 : i32
    %c0_i32_1 = arith.constant 0 : i32
    return %c0_i32, %c0_i32_0 : i32, i32
  }
  func.func @transform_3(%arg0: i32, %arg1: i32) -> (i32, i32) {
    %c0_i32 = arith.constant 0 : i32
    %c0_i32_0 = arith.constant 0 : i32
    %c0_i32_1 = arith.constant 0 : i32
    return %c0_i32, %c0_i32_0 : i32, i32
  }
  func.func @transform_4(%arg0: i32, %arg1: i32) -> (i32, i32) {
    %c0_i32 = arith.constant 0 : i32
    %c0_i32_0 = arith.constant 0 : i32
    %c0_i32_1 = arith.constant 0 : i32
    return %c0_i32, %c0_i32_0 : i32, i32
  }
  func.func @transform_5(%arg0: i32, %arg1: i32) -> (i32, i32, i32) {
    %c0_i32 = arith.constant 0 : i32
    %c0_i32_0 = arith.constant 0 : i32
    return %arg0, %arg1, %c0_i32 : i32, i32, i32
  }
}

</mosaic_0001>

<llo_original>
// kernel: tpu_custom_call.1
$region0: #{tpu_custom_call.1}
  #allocation0 [shape = 'u32[]', space=smem, size = 0x4, offset = 0x4, fixed_abs, tag = 'smem constant byte address 0x4 - core index']
  #allocation1 [shape = 'u32[144,128]{1,0:T(1,128)}', space=vmem, size = 0x12000, scoped, tag = 'internal scratch']
  #allocation2 [shape = 'f32[1,1]{1,0:T(1,128)S(6)}', space=smem, size = 0x200, scoped, tag = 'scoped memory for tpu_custom_call.1']
  %s0 = inlined_call_operand.hbm [shape: f32[2,16,32], index: 0, kind: input, shape index: {}]
  %s1 = inlined_call_operand.hbm [shape: f32[2,16,16], index: 1, kind: input, shape index: {}]
  %s2 = inlined_call_operand.hbm [shape: f32[32,64], index: 2, kind: input, shape index: {}]
  %s3 = inlined_call_operand.vmem [shape: f32[1,64], index: 3, kind: input, shape index: {}]
  %s4 = inlined_call_operand.<no memory space> [shape: f32[1,1], index: 4, kind: input, shape index: {}]
  %s5 = inlined_call_operand.hbm [shape: f32[2,16,64], index: 5, kind: output, shape index: {}]
  %s6 = sld [smem:[#allocation0]]
  $region42: #{tpu_custom_call.1} parent=0
    _
  %s8 = ssub.s32 1, %s6
  %s9 = scalar_select 0, %s8, %s6
  %10 = sst [smem:[#allocation2]] %s4
  $region1: #{tpu_custom_call.1} parent=0
    #allocation3 [shape = 'u8[16384]{0}', space=vmem, size = 0x4000, scoped, tag = 'input window, operand 0, single buffered']
    #allocation4 [shape = 's32[1]{0}', space=sflag, size = 0x4, scoped, tag = 'scoped memory for tpu_custom_call.1']
    #allocation5 [shape = 's32[1]{0}', space=sflag, size = 0x4, scoped, tag = 'scoped memory for tpu_custom_call.1']
    #allocation6 [shape = 'u8[16384]{0}', space=vmem, size = 0x4000, scoped, tag = 'input window, operand 1, single buffered']
    #allocation7 [shape = 's32[1]{0}', space=sflag, size = 0x4, scoped, tag = 'scoped memory for tpu_custom_call.1']
    #allocation8 [shape = 'u8[16384]{0}', space=vmem, size = 0x4000, scoped, tag = 'input window, operand 2, single buffered']
    #allocation9 [shape = 'u8[16384]{0}', space=vmem, size = 0x4000, scoped, tag = 'output window, operand 0, single buffered']
    %11 = vsyncpa [#allocation4], 0
    %12 = vsyncpa [#allocation7], 0
    %13 = vsyncpa [#allocation5], 0
    // Predicated region
    $region2: #{tpu_custom_call.1} parent=1 // pred_check
      _
    $region3: #{tpu_custom_call.1} parent=1 // pred_check_branch
      %15 = sbr.rel (0) target = $region5
    $region4: #{tpu_custom_call.1} parent=1 // pred_region
      %s17 = ssub.s32 512, 512
      %18 = vsyncadd [#allocation4], %s17
      %s19 = sshll.u32 [#allocation3], 4
      %s20 = int_to_ptr.vmem [resolvable:$true] %s19
      %25 = dma.hbm_to_vmem [thread:$0]  %s0, 512, %s20, [#allocation4], 128, 128, 8
    $region5: #{tpu_custom_call.1} parent=1 // pred_fallthru
      _
    // Predicated region
    $region6: #{tpu_custom_call.1} parent=1 // pred_check
      _
    $region7: #{tpu_custom_call.1} parent=1 // pred_check_branch
      %27 = sbr.rel (0) target = $region9
    $region8: #{tpu_custom_call.1} parent=1 // pred_region
      %s29 = ssub.s32 512, 512
      %30 = vsyncadd [#allocation7], %s29
      %s31 = sshll.u32 [#allocation6], 4
      %s32 = int_to_ptr.vmem [resolvable:$true] %s31
      %37 = dma.hbm_to_vmem [thread:$0]  %s1, 512, %s32, [#allocation7], 128, 128, 8
    $region9: #{tpu_custom_call.1} parent=1 // pred_fallthru
      _
    // Predicated region
    $region10: #{tpu_custom_call.1} parent=1 // pred_check
      _
    $region11: #{tpu_custom_call.1} parent=1 // pred_check_branch
      %39 = sbr.rel (0) target = $region13
    $region12: #{tpu_custom_call.1} parent=1 // pred_region
      %s41 = ssub.s32 512, 512
      %42 = vsyncadd [#allocation7], %s41
      %s43 = sshll.u32 [#allocation8], 4
      %s44 = int_to_ptr.vmem [resolvable:$true] %s43
      %49 = dma.hbm_to_vmem [thread:$0]  %s2, 512, %s44, [#allocation7], 128, 128, 8
    $region13: #{tpu_custom_call.1} parent=1 // pred_fallthru
      _
    // Predicated region
    $region14: #{tpu_custom_call.1} parent=1 // pred_check
      _
    $region15: #{tpu_custom_call.1} parent=1 // pred_check_branch
      %51 = sbr.rel (0) target = $region17
    $region16: #{tpu_custom_call.1} parent=1 // pred_region
      _
    $region17: #{tpu_custom_call.1} parent=1 // pred_fallthru
      _
    // Predicated region
    $region18: #{tpu_custom_call.1} parent=1 // pred_check
      _
    $region19: #{tpu_custom_call.1} parent=1 // pred_check_branch
      %53 = sbr.rel (0) target = $region21
    $region20: #{tpu_custom_call.1} parent=1 // pred_region
      _
    $region21: #{tpu_custom_call.1} parent=1 // pred_fallthru
      _
    // Predicated region
    $region22: #{tpu_custom_call.1} parent=1 // pred_check
      _
    $region23: #{tpu_custom_call.1} parent=1 // pred_check_branch
      %55 = sbr.rel (0) target = $region25
    $region24: #{tpu_custom_call.1} parent=1 // pred_region
      %56 = dma.done [#allocation4], 512
    $region25: #{tpu_custom_call.1} parent=1 // pred_fallthru
      _
    // Predicated region
    $region26: #{tpu_custom_call.1} parent=1 // pred_check
      _
    $region27: #{tpu_custom_call.1} parent=1 // pred_check_branch
      %58 = sbr.rel (0) target = $region29
    $region28: #{tpu_custom_call.1} parent=1 // pred_region
      %59 = dma.done [#allocation7], 512
    $region29: #{tpu_custom_call.1} parent=1 // pred_fallthru
      _
    // Predicated region
    $region30: #{tpu_custom_call.1} parent=1 // pred_check
      _
    $region31: #{tpu_custom_call.1} parent=1 // pred_check_branch
      %61 = sbr.rel (0) target = $region33
    $region32: #{tpu_custom_call.1} parent=1 // pred_region
      %62 = dma.done [#allocation7], 512
    $region33: #{tpu_custom_call.1} parent=1 // pred_fallthru
      _
    %v63 = vld [vmem:[#allocation6] sm:$0xff]
    %v64 = vld [vmem:[#allocation6 + $0x8] sm:$0xff]
    %v65 = vld [vmem:[#allocation6 + $0x10] sm:$0xff]
    %v66 = vld [vmem:[#allocation6 + $0x18] sm:$0xff]
    %v67 = vld [vmem:[#allocation3] sm:$0xff]
    %v68 = vld [vmem:[#allocation3 + $0x8] sm:$0xff]
    %v69 = vld [vmem:[#allocation3 + $0x10] sm:$0xff]
    %v70 = vld [vmem:[#allocation3 + $0x18] sm:$0xff]
    %vm71 = vcmask 130048
    %v73 = vsel %vm71, %v63, 0
    %v76 = vsel %vm71, %v64, 0
    %78 = vmatprep.subr.mxu0 0.0
    %79 = vmatpush1.msra.mxu0 %v67
    %80 = vmatprep.subr.mxu0 0.0
    %81 = vmatpush1.msra.mxu0 %v68
    %82 = vmatprep.subr.mxu0 0.0
    %83 = vmatpush1.msra.mxu0 0.0
    %84 = vmatprep.subr.mxu0 0.0
    %85 = vmatpush1.msra.mxu0 0.0
    %86 = vmatprep.subr.mxu0 0.0
    %87 = vmatpush1.msra.mxu0 0.0
    %88 = vmatprep.subr.mxu0 0.0
    %89 = vmatpush1.msra.mxu0 0.0
    %90 = vmatprep.subr.mxu0 0.0
    %91 = vmatpush1.msra.mxu0 0.0
    %92 = vmatprep.subr.mxu0 0.0
    %93 = vmatpush1.msra.mxu0 0.0
    %94 = vmatprep.subr.mxu0 0.0
    %95 = vmatpush1.msra.mxu0 0.0
    %96 = vmatprep.subr.mxu0 0.0
    %97 = vmatpush1.msra.mxu0 0.0
    %98 = vmatprep.subr.mxu0 0.0
    %99 = vmatpush1.msra.mxu0 0.0
    %100 = vmatprep.subr.mxu0 0.0
    %101 = vmatpush1.msra.mxu0 0.0
    %102 = vmatprep.subr.mxu0 0.0
    %103 = vmatpush1.msra.mxu0 0.0
    %104 = vmatprep.subr.mxu0 0.0
    %105 = vmatpush1.msra.mxu0 0.0
    %106 = vmatprep.subr.mxu0 0.0
    %107 = vmatpush1.msra.mxu0 0.0
    %108 = vmatprep.subr.mxu0 0.0
    %109 = vmatpush1.msra.mxu0 0.0
    %110 = vmatprep.subr.mxu0 0.0
    %111 = vmatpush1.msra.mxu0 0.0
    %112 = vmatprep.subr.mxu0 0.0
    %113 = vmatpush1.msra.mxu0 0.0
    %114 = vmatprep.subr.mxu0 0.0
    %115 = vmatpush1.msra.mxu0 0.0
    %116 = vmatprep.subr.mxu0 0.0
    %117 = vmatpush1.msra.mxu0 0.0
    %118 = vmatprep.subr.mxu0 0.0
    %119 = vmatpush1.msra.mxu0 0.0
    %120 = vmatprep.subr.mxu0 0.0
    %121 = vmatpush1.msra.mxu0 0.0
    %122 = vmatprep.subr.mxu0 0.0
    %123 = vmatpush1.msra.mxu0 0.0
    %124 = vmatprep.subr.mxu0 0.0
    %125 = vmatpush1.msra.mxu0 0.0
    %126 = vmatprep.subr.mxu0 0.0
    %127 = vmatpush1.msra.mxu0 0.0
    %128 = vmatprep.subr.mxu0 0.0
    %129 = vmatpush1.msra.mxu0 0.0
    %130 = vmatprep.subr.mxu0 0.0
    %131 = vmatpush1.msra.mxu0 0.0
    %132 = vmatprep.subr.mxu0 0.0
    %133 = vmatpush1.msra.mxu0 0.0
    %134 = vmatprep.subr.mxu0 0.0
    %135 = vmatpush1.msra.mxu0 0.0
    %136 = vmatprep.subr.mxu0 0.0
    %137 = vmatpush1.msra.mxu0 0.0
    %138 = vmatprep.subr.mxu0 0.0
    %139 = vmatpush1.msra.mxu0 0.0
    %140 = vmatprep.subr.mxu0 0.0
    %141 = vmatpush1.msra.mxu0 0.0
    %142 = vmatprep.mubr.f32.mxu0 0.0
    %143 = vmatmul.mubr.f32.gmra.mrb[0].mxu0 %v73
    %v144 = vpop.f32.mrb[0].mxu0
    %v145 = vadd.f32 0.0, %v144
    %v146 = vpop.f32.mrb[0].mxu0
    %147 = vmatprep.mubr.f32.mxu0 0.0
    %148 = vmatmul.mubr.f32.gmra.mrb[0].mxu0 %v76
    %v149 = vpop.f32.mrb[0].mxu0
    %v150 = vadd.f32 0.0, %v149
    %v151 = vpop.f32.mrb[0].mxu0
    %152 = vdwg.mxu0
    %v154 = vsel %vm71, %v65, 0
    %v157 = vsel %vm71, %v66, 0
    %159 = vmatprep.subr.mxu0 0.0
    %160 = vmatpush1.msra.mxu0 %v69
    %161 = vmatprep.subr.mxu0 0.0
    %162 = vmatpush1.msra.mxu0 %v70
    %163 = vmatprep.subr.mxu0 0.0
    %164 = vmatpush1.msra.mxu0 0.0
    %165 = vmatprep.subr.mxu0 0.0
    %166 = vmatpush1.msra.mxu0 0.0
    %167 = vmatprep.subr.mxu0 0.0
    %168 = vmatpush1.msra.mxu0 0.0
    %169 = vmatprep.subr.mxu0 0.0
    %170 = vmatpush1.msra.mxu0 0.0
    %171 = vmatprep.subr.mxu0 0.0
    %172 = vmatpush1.msra.mxu0 0.0
    %173 = vmatprep.subr.mxu0 0.0
    %174 = vmatpush1.msra.mxu0 0.0
    %175 = vmatprep.subr.mxu0 0.0
    %176 = vmatpush1.msra.mxu0 0.0
    %177 = vmatprep.subr.mxu0 0.0
    %178 = vmatpush1.msra.mxu0 0.0
    %179 = vmatprep.subr.mxu0 0.0
    %180 = vmatpush1.msra.mxu0 0.0
    %181 = vmatprep.subr.mxu0 0.0
    %182 = vmatpush1.msra.mxu0 0.0
    %183 = vmatprep.subr.mxu0 0.0
    %184 = vmatpush1.msra.mxu0 0.0
    %185 = vmatprep.subr.mxu0 0.0
    %186 = vmatpush1.msra.mxu0 0.0
    %187 = vmatprep.subr.mxu0 0.0
    %188 = vmatpush1.msra.mxu0 0.0
    %189 = vmatprep.subr.mxu0 0.0
    %190 = vmatpush1.msra.mxu0 0.0
    %191 = vmatprep.subr.mxu0 0.0
    %192 = vmatpush1.msra.mxu0 0.0
    %193 = vmatprep.subr.mxu0 0.0
    %194 = vmatpush1.msra.mxu0 0.0
    %195 = vmatprep.subr.mxu0 0.0
    %196 = vmatpush1.msra.mxu0 0.0
    %197 = vmatprep.subr.mxu0 0.0
    %198 = vmatpush1.msra.mxu0 0.0
    %199 = vmatprep.subr.mxu0 0.0
    %200 = vmatpush1.msra.mxu0 0.0
    %201 = vmatprep.subr.mxu0 0.0
    %202 = vmatpush1.msra.mxu0 0.0
    %203 = vmatprep.subr.mxu0 0.0
    %204 = vmatpush1.msra.mxu0 0.0
    %205 = vmatprep.subr.mxu0 0.0
    %206 = vmatpush1.msra.mxu0 0.0
    %207 = vmatprep.subr.mxu0 0.0
    %208 = vmatpush1.msra.mxu0 0.0
    %209 = vmatprep.subr.mxu0 0.0
    %210 = vmatpush1.msra.mxu0 0.0
    %211 = vmatprep.subr.mxu0 0.0
    %212 = vmatpush1.msra.mxu0 0.0
    %213 = vmatprep.subr.mxu0 0.0
    %214 = vmatpush1.msra.mxu0 0.0
    %215 = vmatprep.subr.mxu0 0.0
    %216 = vmatpush1.msra.mxu0 0.0
    %217 = vmatprep.subr.mxu0 0.0
    %218 = vmatpush1.msra.mxu0 0.0
    %219 = vmatprep.subr.mxu0 0.0
    %220 = vmatpush1.msra.mxu0 0.0
    %221 = vmatprep.subr.mxu0 0.0
    %222 = vmatpush1.msra.mxu0 0.0
    %223 = vmatprep.mubr.f32.mxu0 0.0
    %224 = vmatmul.mubr.f32.gmra.mrb[0].mxu0 %v154
    %v225 = vpop.f32.mrb[0].mxu0
    %v226 = vadd.f32 0.0, %v225
    %v227 = vpop.f32.mrb[0].mxu0
    %228 = vmatprep.mubr.f32.mxu0 0.0
    %229 = vmatmul.mubr.f32.gmra.mrb[0].mxu0 %v157
    %v230 = vpop.f32.mrb[0].mxu0
    %v231 = vadd.f32 0.0, %v230
    %v232 = vpop.f32.mrb[0].mxu0
    %233 = vdwg.mxu0
    %v234 = vld [vmem:[#allocation8] sm:$0xff]
    %v235 = vld [vmem:[#allocation8 + $0x8] sm:$0xff]
    %v236 = vld [vmem:[#allocation8 + $0x10] sm:$0xff]
    %v237 = vld [vmem:[#allocation8 + $0x18] sm:$0xff]
    %vm238 = vcmask 261120
    %v240 = vsel %vm238, %v145, 0
    %v243 = vsel %vm238, %v150, 0
    %v246 = vsel %vm238, %v226, 0
    %v249 = vsel %vm238, %v231, 0
    %251 = vmatprep.subr.mxu0 0.0
    %252 = vmatpush1.msra.mxu0 %v234
    %253 = vmatprep.subr.mxu0 0.0
    %254 = vmatpush1.msra.mxu0 %v235
    %255 = vmatprep.subr.mxu0 0.0
    %256 = vmatpush1.msra.mxu0 %v236
    %257 = vmatprep.subr.mxu0 0.0
    %258 = vmatpush1.msra.mxu0 %v237
    %259 = vmatprep.subr.mxu0 0.0
    %260 = vmatpush1.msra.mxu0 0.0
    %261 = vmatprep.subr.mxu0 0.0
    %262 = vmatpush1.msra.mxu0 0.0
    %263 = vmatprep.subr.mxu0 0.0
    %264 = vmatpush1.msra.mxu0 0.0
    %265 = vmatprep.subr.mxu0 0.0
    %266 = vmatpush1.msra.mxu0 0.0
    %267 = vmatprep.subr.mxu0 0.0
    %268 = vmatpush1.msra.mxu0 0.0
    %269 = vmatprep.subr.mxu0 0.0
    %270 = vmatpush1.msra.mxu0 0.0
    %271 = vmatprep.subr.mxu0 0.0
    %272 = vmatpush1.msra.mxu0 0.0
    %273 = vmatprep.subr.mxu0 0.0
    %274 = vmatpush1.msra.mxu0 0.0
    %275 = vmatprep.subr.mxu0 0.0
    %276 = vmatpush1.msra.mxu0 0.0
    %277 = vmatprep.subr.mxu0 0.0
    %278 = vmatpush1.msra.mxu0 0.0
    %279 = vmatprep.subr.mxu0 0.0
    %280 = vmatpush1.msra.mxu0 0.0
    %281 = vmatprep.subr.mxu0 0.0
    %282 = vmatpush1.msra.mxu0 0.0
    %283 = vmatprep.subr.mxu0 0.0
    %284 = vmatpush1.msra.mxu0 0.0
    %285 = vmatprep.subr.mxu0 0.0
    %286 = vmatpush1.msra.mxu0 0.0
    %287 = vmatprep.subr.mxu0 0.0
    %288 = vmatpush1.msra.mxu0 0.0
    %289 = vmatprep.subr.mxu0 0.0
    %290 = vmatpush1.msra.mxu0 0.0
    %291 = vmatprep.subr.mxu0 0.0
    %292 = vmatpush1.msra.mxu0 0.0
    %293 = vmatprep.subr.mxu0 0.0
    %294 = vmatpush1.msra.mxu0 0.0
    %295 = vmatprep.subr.mxu0 0.0
    %296 = vmatpush1.msra.mxu0 0.0
    %297 = vmatprep.subr.mxu0 0.0
    %298 = vmatpush1.msra.mxu0 0.0
    %299 = vmatprep.subr.mxu0 0.0
    %300 = vmatpush1.msra.mxu0 0.0
    %301 = vmatprep.subr.mxu0 0.0
    %302 = vmatpush1.msra.mxu0 0.0
    %303 = vmatprep.subr.mxu0 0.0
    %304 = vmatpush1.msra.mxu0 0.0
    %305 = vmatprep.subr.mxu0 0.0
    %306 = vmatpush1.msra.mxu0 0.0
    %307 = vmatprep.subr.mxu0 0.0
    %308 = vmatpush1.msra.mxu0 0.0
    %309 = vmatprep.subr.mxu0 0.0
    %310 = vmatpush1.msra.mxu0 0.0
    %311 = vmatprep.subr.mxu0 0.0
    %312 = vmatpush1.msra.mxu0 0.0
    %313 = vmatprep.subr.mxu0 0.0
    %314 = vmatpush1.msra.mxu0 0.0
    %315 = vmatprep.mubr.f32.mxu0 0.0
    %316 = vmatmul.mubr.f32.gmra.mrb[0].mxu0 %v240
    %v317 = vpop.f32.mrb[0].mxu0
    %v318 = vadd.f32 0.0, %v317
    %v319 = vpop.f32.mrb[0].mxu0
    %320 = vmatprep.mubr.f32.mxu0 0.0
    %321 = vmatmul.mubr.f32.gmra.mrb[0].mxu0 %v243
    %v322 = vpop.f32.mrb[0].mxu0
    %v323 = vadd.f32 0.0, %v322
    %v324 = vpop.f32.mrb[0].mxu0
    %325 = vmatprep.mubr.f32.mxu0 0.0
    %326 = vmatmul.mubr.f32.gmra.mrb[0].mxu0 %v246
    %v327 = vpop.f32.mrb[0].mxu0
    %v328 = vadd.f32 0.0, %v327
    %v329 = vpop.f32.mrb[0].mxu0
    %330 = vmatprep.mubr.f32.mxu0 0.0
    %331 = vmatmul.mubr.f32.gmra.mrb[0].mxu0 %v249
    %v332 = vpop.f32.mrb[0].mxu0
    %v333 = vadd.f32 0.0, %v332
    %v334 = vpop.f32.mrb[0].mxu0
    %335 = vdwg.mxu0
    %v336 = vld [vmem:[%s3] sm:$0x1]
    %v338 = vlaneseq
    %v339 = vshrl.u32 %v338, 7
    %v340 = vsub.s32 0, %v339
    %v341 = vrot.slane %v336, %v340
    %v343 = vadd.f32 %v318, %v341
    %v344 = vadd.f32 %v323, %v341
    %v345 = vadd.f32 %v328, %v341
    %v346 = vadd.f32 %v333, %v341
    %s347 = sld [smem:[#allocation2]]
    %vm348 = vcmp.ge.f32.partialorder %v343, 0.0
    %vm349 = vcmp.ge.f32.partialorder %v344, 0.0
    %vm350 = vcmp.ge.f32.partialorder %v345, 0.0
    %vm351 = vcmp.ge.f32.partialorder %v346, 0.0
    %v352 = vstv %s347
    %v353 = vmul.f32 %v352, %v343
    %v354 = vmul.f32 %v352, %v344
    %v355 = vmul.f32 %v352, %v345
    %v356 = vmul.f32 %v352, %v346
    %v357 = vsel %vm348, %v343, %v353
    %v358 = vsel %vm349, %v344, %v354
    %v359 = vsel %vm350, %v345, %v355
    %v360 = vsel %vm351, %v346, %v356
    %vm361 = vcmask 523264
    %362 = vst.msk [vmem:[#allocation9] sm:$0xff] %vm361, %v357
    %363 = vst.msk [vmem:[#allocation9 + $0x8] sm:$0xff] %vm361, %v358
    %364 = vst.msk [vmem:[#allocation9 + $0x10] sm:$0xff] %vm361, %v359
    %365 = vst.msk [vmem:[#allocation9 + $0x18] sm:$0xff] %vm361, %v360
    // Predicated region
    $region34: #{tpu_custom_call.1} parent=1 // pred_check
      _
    $region35: #{tpu_custom_call.1} parent=1 // pred_check_branch
      %367 = sbr.rel (0) target = $region37
    $region36: #{tpu_custom_call.1} parent=1 // pred_region
      %s369 = ssub.s32 512, 512
      %370 = vsyncadd [#allocation5], %s369
      %s371 = sshll.u32 [#allocation9], 4
      %s372 = int_to_ptr.vmem [resolvable:$true] %s371
      %377 = dma.vmem_to_hbm [thread:$0]  %s372, 512, %s5, [#allocation5], 128, 128, 8
    $region37: #{tpu_custom_call.1} parent=1 // pred_fallthru
      _
    // Predicated region
    $region38: #{tpu_custom_call.1} parent=1 // pred_check
      _
    $region39: #{tpu_custom_call.1} parent=1 // pred_check_branch
      %379 = sbr.rel (0) target = $region41
    $region40: #{tpu_custom_call.1} parent=1 // pred_region
      %380 = dma.done [#allocation5], 512
    $region41: #{tpu_custom_call.1} parent=1 // pred_fallthru
      _
    %381 = vsyncpa [#allocation4], 1
    %382 = vsyncpa [#allocation7], 1
    %383 = vsyncpa [#allocation5], 1

</llo_original>
